<compile_context>
chip_gen: v7x
topology: tpu7x:2x2x1
jax: 0.10.0
libtpu: 0.0.40
codegen_flags: <defaults>
</compile_context>

<pallas_src>
import functools

import jax
import jax.numpy as jnp
import numpy as np
from jax.experimental import pallas as pl
from jax.experimental.pallas import tpu as pltpu

_LANE = 128
_SUBLANE = 8
# ~256 phi rows per grid step fills the 256-wide v6e/v7x MXU and is still a
# cheap 2-pass LHS on v5e; at small B this collapses to a single grid step.
_ROWS_TARGET = 256


def _round_up(x, m):
    return ((x + m - 1) // m) * m


# --------------------------------------------------------------------------
# one-time parameter packing (NOT per forward call)
# --------------------------------------------------------------------------
def pack_deepsets_params(params_list, dims, *, matmul_dtype=jnp.bfloat16):
    """Fuse per-branch (w1,b1,w2,b2,w3,b3,w4,b4) into block-diagonal stacks.

    params_list[i] belongs to a branch of feature dim dims[i].  Branch i's
    features live in lanes [off_i, off_i + dims[i]) of a common, lane-dense
    feature space padded to a multiple of 128.

    Returns:
      w_stack: (4, dp, dp) block-diagonal weights in `matmul_dtype`
      b_stack: (4, dp) biases in f32 (added to the f32 accumulator)
    """
    d_total = sum(dims)
    dp = _round_up(d_total, _LANE)
    w_stack = jnp.zeros((4, dp, dp), jnp.float32)
    b_stack = jnp.zeros((4, dp), jnp.float32)
    off = 0
    for params, d in zip(params_list, dims):
        w1, b1, w2, b2, w3, b3, w4, b4 = params
        for layer, (w, b) in enumerate(((w1, b1), (w2, b2), (w3, b3), (w4, b4))):
            w_stack = w_stack.at[layer, off:off + d, off:off + d].set(
                w.astype(jnp.float32))
            b_stack = b_stack.at[layer, off:off + d].set(
                b.reshape(-1).astype(jnp.float32))
        off += d
    return w_stack.astype(matmul_dtype), b_stack


@functools.lru_cache(maxsize=None)
def _mean_matrix(tb, n_pad, n_real):
    """Block-diagonal 1/N aggregation matrix; row i averages set i's N real
    rows and puts exactly zero weight on padded set rows."""
    m = np.zeros((tb, tb * n_pad), np.float32)
    for i in range(tb):
        m[i, i * n_pad:i * n_pad + n_real] = 1.0 / n_real
    return m


# --------------------------------------------------------------------------
# kernel
# --------------------------------------------------------------------------
def _deepsets_kernel(mean_ref, x_ref, w_ref, b_ref, o_ref, *, matmul_dtype):
    b = b_ref[...]                                   # (4, dp) f32
    x = x_ref[...]                                   # (rows, dp) matmul_dtype

    # phi: Linear -> SiLU -> Linear -> SiLU on a dense (rows, dp) slab.
    h = jnp.dot(x, w_ref[0], preferred_element_type=jnp.float32) + b[0:1]
    h = h * jax.nn.sigmoid(h)                        # f32 elementwise (v5e-safe)
    h = jnp.dot(h.astype(matmul_dtype), w_ref[1],
                preferred_element_type=jnp.float32) + b[1:2]
    h = h * jax.nn.sigmoid(h)

    # Permutation-invariant mean over each set, folded into the MXU.
    agg = jnp.dot(mean_ref[...], h, preferred_element_type=jnp.float32)  # (tb, dp)

    # rho: Linear -> SiLU -> Linear, batched over the tb aggregated rows.
    r = jnp.dot(agg.astype(matmul_dtype), w_ref[2],
                preferred_element_type=jnp.float32) + b[2:3]
    r = r * jax.nn.sigmoid(r)
    r = jnp.dot(r.astype(matmul_dtype), w_ref[3],
                preferred_element_type=jnp.float32) + b[3:4]

    o_ref[...] = r.astype(o_ref.dtype)               # (tb, dp) lane-dense store


# --------------------------------------------------------------------------
# wrapper
# --------------------------------------------------------------------------
def _deepsets_fused(x, w_stack, b_stack, *, matmul_dtype):
    """x: (B, N, d_total) concatenated branch features.  Returns (B, dp)."""
    B, N, d_total = x.shape
    dp = w_stack.shape[-1]

    n_pad = _round_up(N, _SUBLANE)
    # Tile sizing: ~_ROWS_TARGET phi rows per grid step; one fat step at small
    # B.  tb is a multiple of 8 (or == b_pad) so all blocks obey (8,128).
    tb_cap = max(_SUBLANE, (_ROWS_TARGET // n_pad) // _SUBLANE * _SUBLANE)
    b_pad8 = _round_up(B, _SUBLANE)
    tb = min(tb_cap, b_pad8)
    b_pad = _round_up(b_pad8, tb)
    grid = (b_pad // tb,)
    rows = tb * n_pad                                 # phi rows per grid step

    # Pad set/batch/feature axes and flatten to (b_pad*n_pad, dp).  Under jit
    # this fuses into a single pad+cast; padded rows are sliced off at the end.
    xp = jnp.zeros((b_pad, n_pad, dp), matmul_dtype)
    xp = xp.at[:B, :N, :d_total].set(x.astype(matmul_dtype))
    xp = xp.reshape(b_pad * n_pad, dp)

    mean_mat = jnp.asarray(_mean_matrix(tb, n_pad, N))   # jit-time constant

    out = pl.pallas_call(
        functools.partial(_deepsets_kernel, matmul_dtype=matmul_dtype),
        out_shape=jax.ShapeDtypeStruct((b_pad, dp), x.dtype),
        grid=grid,
        in_specs=[
            pl.BlockSpec((tb, rows), lambda i: (0, 0)),      # mean matrix
            pl.BlockSpec((rows, dp), lambda i: (i, 0)),      # activation slab
            pl.BlockSpec((4, dp, dp), lambda i: (0, 0, 0)),  # fused weight stack
            pl.BlockSpec((4, dp), lambda i: (0, 0)),         # fused bias stack
        ],
        out_specs=pl.BlockSpec((tb, dp), lambda i: (i, 0)),
        compiler_params=pltpu.CompilerParams(
            dimension_semantics=("parallel",)),
    )(mean_mat, xp, w_stack, b_stack)
    return out[:B]


@functools.partial(jax.jit,
                   static_argnames=("scalar_dim", "vector_dim", "matmul_dtype"))
def deepsets_forward(scalar, vector, w_stack, b_stack, *, scalar_dim, vector_dim,
                     matmul_dtype=jnp.bfloat16):
    """Mirrors DeepSets.forward.

    scalar: (B, N, scalar_dim) or None
    vector: (B, N, vector_dim, 3) or None
    w_stack/b_stack: from pack_deepsets_params (branch order: scalar, vector).
    returns (scalar_out (B, scalar_dim), vector_out (B, vector_dim, 3))
    """
    xs = []
    if scalar_dim > 0 and scalar is not None:
        xs.append(scalar)
    if vector_dim > 0 and vector is not None:
        B, N = vector.shape[0], vector.shape[1]
        xs.append(vector.reshape(B, N, vector_dim * 3))   # row-major == torch .view
    if not xs:
        return None, None

    x = jnp.concatenate(xs, axis=-1) if len(xs) > 1 else xs[0]
    out = _deepsets_fused(x, w_stack, b_stack, matmul_dtype=matmul_dtype)

    scalar_out, vector_out = None, None
    off = 0
    if scalar_dim > 0 and scalar is not None:
        scalar_out = out[:, :scalar_dim]
        off = scalar_dim
    if vector_dim > 0 and vector is not None:
        vector_out = out[:, off:off + vector_dim * 3].reshape(
            out.shape[0], vector_dim, 3)
    return scalar_out, vector_out


# --------------------------------------------------------------------------
# parameter init + pure-JAX reference for verification
# --------------------------------------------------------------------------
def _init_branch_params(key, dim, dtype=jnp.float32):
    keys = jax.random.split(key, 8)
    scale = 1.0 / jnp.sqrt(jnp.float32(dim))
    ws = [jax.random.normal(keys[2 * i], (dim, dim), dtype) * scale for i in range(4)]
    bs = [jax.random.normal(keys[2 * i + 1], (1, dim), dtype) * 0.01 for i in range(4)]
    return (ws[0], bs[0], ws[1], bs[1], ws[2], bs[2], ws[3], bs[3])


def _ref_branch(x, params):
    w1, b1, w2, b2, w3, b3, w4, b4 = params
    h = jax.nn.silu(x @ w1 + b1[0])
    h = jax.nn.silu(h @ w2 + b2[0])
    agg = h.mean(axis=1)
    r = jax.nn.silu(agg @ w3 + b3[0])
    return r @ w4 + b4[0]


if __name__ == "__main__":
    B, N = 2, 8            # batch, set size (num conformers)
    scalar_dim = 32
    vector_dim = 4         # flattened vector feature dim = 12

    key = jax.random.PRNGKey(0)
    k_sp, k_vp, k_s, k_v = jax.random.split(key, 4)

    scalar_params = _init_branch_params(k_sp, scalar_dim)
    vector_params = _init_branch_params(k_vp, vector_dim * 3)

    scalar = jax.random.normal(k_s, (B, N, scalar_dim), jnp.float32)
    vector = jax.random.normal(k_v, (B, N, vector_dim, 3), jnp.float32)

    ref_s = _ref_branch(scalar, scalar_params)
    ref_v = _ref_branch(vector.reshape(B, N, vector_dim * 3),
                        vector_params).reshape(B, vector_dim, 3)

    # f32 matmul path (bit-tight check).
    w32, b32 = pack_deepsets_params(
        [scalar_params, vector_params], [scalar_dim, vector_dim * 3],
        matmul_dtype=jnp.float32)
    s_out, v_out = deepsets_forward(
        scalar, vector, w32, b32,
        scalar_dim=scalar_dim, vector_dim=vector_dim, matmul_dtype=jnp.float32)
    jax.block_until_ready(s_out)
    jax.block_until_ready(v_out)
    assert s_out.shape == (B, scalar_dim)
    assert v_out.shape == (B, vector_dim, 3)
    assert jnp.allclose(s_out, ref_s, atol=1e-5, rtol=1e-5)
    assert jnp.allclose(v_out, ref_v, atol=1e-5, rtol=1e-5)

    # bf16 matmul-operand path (default; v6e/v7x MXU fast path, f32 accumulation).
    wbf, bbf = pack_deepsets_params(
        [scalar_params, vector_params], [scalar_dim, vector_dim * 3])
    s_bf, v_bf = deepsets_forward(
        scalar, vector, wbf, bbf, scalar_dim=scalar_dim, vector_dim=vector_dim)
    jax.block_until_ready(s_bf)
    jax.block_until_ready(v_bf)
    assert jnp.allclose(s_bf, ref_s, atol=1e-1, rtol=1e-1)
    assert jnp.allclose(v_bf, ref_v, atol=1e-1, rtol=1e-1)

    print("KERNEL_OK")
</pallas_src>

<mosaic_0001>
module attributes {stable_mosaic.version = 11 : i64} {
  func.func @_deepsets_kernel(%arg0: i32, %arg1: memref<8x64xf32, #tpu.memory_space<vmem>>, %arg2: memref<64x128xf32, #tpu.memory_space<vmem>>, %arg3: memref<4x128x128xf32, #tpu.memory_space<vmem>>, %arg4: memref<4x128xf32, #tpu.memory_space<vmem>>, %arg5: memref<8x128xf32, #tpu.memory_space<vmem>>) attributes {dimension_semantics = [#tpu.dimension_semantics<parallel>], iteration_bounds = array<i64: 1>, scalar_prefetch = 0 : i64, scratch_operands = 0 : i64, tpu.core_type = #tpu.core_type<tc>, window_params = [{pipeline_mode = #tpu.pipeline_mode<synchronous>, transform_indices = @transform_0, window_bounds = array<i64: 8, 64>}, {transform_indices = @transform_1, window_bounds = array<i64: 64, 128>}, {pipeline_mode = #tpu.pipeline_mode<synchronous>, transform_indices = @transform_2, window_bounds = array<i64: 4, 128, 128>}, {pipeline_mode = #tpu.pipeline_mode<synchronous>, transform_indices = @transform_3, window_bounds = array<i64: 4, 128>}, {transform_indices = @transform_4, window_bounds = array<i64: 8, 128>}]} {
    %c0 = arith.constant 0 : index
    %c0_0 = arith.constant 0 : index
    %0 = vector.load %arg4[%c0, %c0_0] : memref<4x128xf32, #tpu.memory_space<vmem>>, vector<4x128xf32>
    %c0_1 = arith.constant 0 : index
    %c0_2 = arith.constant 0 : index
    %1 = vector.load %arg2[%c0_1, %c0_2] : memref<64x128xf32, #tpu.memory_space<vmem>>, vector<64x128xf32>
    %c0_3 = arith.constant 0 : index
    %c0_4 = arith.constant 0 : index
    %c0_5 = arith.constant 0 : index
    %2 = vector.load %arg3[%c0_3, %c0_4, %c0_5] : memref<4x128x128xf32, #tpu.memory_space<vmem>>, vector<1x128x128xf32>
    %3 = vector.shape_cast %2 : vector<1x128x128xf32> to vector<128x128xf32>
    %cst = arith.constant dense<0.000000e+00> : vector<64x128xf32>
    %4 = tpu.matmul %1, %3, %cst {dimension_numbers = #tpu.dot_dimension_numbers<[1], [0], [0], [1], [0, 0, 1, 1], [], []>} : vector<64x128xf32>, vector<128x128xf32>, vector<64x128xf32> -> vector<64x128xf32>
    %5 = vector.extract_strided_slice %0 {offsets = [0, 0], sizes = [1, 128], strides = [1, 1]} : vector<4x128xf32> to vector<1x128xf32>
    %6 = vector.broadcast %5 : vector<1x128xf32> to vector<64x128xf32>
    %7 = arith.addf %4, %6 : vector<64x128xf32>
    %8 = arith.negf %7 : vector<64x128xf32>
    %9 = math.exp %8 : vector<64x128xf32>
    %cst_6 = arith.constant 1.000000e+00 : f32
    %10 = vector.broadcast %cst_6 : f32 to vector<64x128xf32>
    %11 = arith.addf %10, %9 : vector<64x128xf32>
    %12 = arith.divf %10, %11 : vector<64x128xf32>
    %13 = arith.mulf %7, %12 : vector<64x128xf32>
    %c1 = arith.constant 1 : index
    %c0_7 = arith.constant 0 : index
    %c0_8 = arith.constant 0 : index
    %14 = vector.load %arg3[%c1, %c0_7, %c0_8] : memref<4x128x128xf32, #tpu.memory_space<vmem>>, vector<1x128x128xf32>
    %15 = vector.shape_cast %14 : vector<1x128x128xf32> to vector<128x128xf32>
    %cst_9 = arith.constant dense<0.000000e+00> : vector<64x128xf32>
    %16 = tpu.matmul %13, %15, %cst_9 {dimension_numbers = #tpu.dot_dimension_numbers<[1], [0], [0], [1], [0, 0, 1, 1], [], []>} : vector<64x128xf32>, vector<128x128xf32>, vector<64x128xf32> -> vector<64x128xf32>
    %17 = vector.extract_strided_slice %0 {offsets = [1, 0], sizes = [1, 128], strides = [1, 1]} : vector<4x128xf32> to vector<1x128xf32>
    %18 = vector.broadcast %17 : vector<1x128xf32> to vector<64x128xf32>
    %19 = arith.addf %16, %18 : vector<64x128xf32>
    %20 = arith.negf %19 : vector<64x128xf32>
    %21 = math.exp %20 : vector<64x128xf32>
    %cst_10 = arith.constant 1.000000e+00 : f32
    %22 = vector.broadcast %cst_10 : f32 to vector<64x128xf32>
    %23 = arith.addf %22, %21 : vector<64x128xf32>
    %24 = arith.divf %22, %23 : vector<64x128xf32>
    %25 = arith.mulf %19, %24 : vector<64x128xf32>
    %c0_11 = arith.constant 0 : index
    %c0_12 = arith.constant 0 : index
    %26 = vector.load %arg1[%c0_11, %c0_12] : memref<8x64xf32, #tpu.memory_space<vmem>>, vector<8x64xf32>
    %cst_13 = arith.constant dense<0.000000e+00> : vector<8x128xf32>
    %27 = tpu.matmul %26, %25, %cst_13 {dimension_numbers = #tpu.dot_dimension_numbers<[1], [0], [0], [1], [0, 0, 1, 1], [], []>} : vector<8x64xf32>, vector<64x128xf32>, vector<8x128xf32> -> vector<8x128xf32>
    %c2 = arith.constant 2 : index
    %c0_14 = arith.constant 0 : index
    %c0_15 = arith.constant 0 : index
    %28 = vector.load %arg3[%c2, %c0_14, %c0_15] : memref<4x128x128xf32, #tpu.memory_space<vmem>>, vector<1x128x128xf32>
    %29 = vector.shape_cast %28 : vector<1x128x128xf32> to vector<128x128xf32>
    %cst_16 = arith.constant dense<0.000000e+00> : vector<8x128xf32>
    %30 = tpu.matmul %27, %29, %cst_16 {dimension_numbers = #tpu.dot_dimension_numbers<[1], [0], [0], [1], [0, 0, 1, 1], [], []>} : vector<8x128xf32>, vector<128x128xf32>, vector<8x128xf32> -> vector<8x128xf32>
    %31 = vector.extract_strided_slice %0 {offsets = [2, 0], sizes = [1, 128], strides = [1, 1]} : vector<4x128xf32> to vector<1x128xf32>
    %32 = vector.broadcast %31 : vector<1x128xf32> to vector<8x128xf32>
    %33 = arith.addf %30, %32 : vector<8x128xf32>
    %34 = arith.negf %33 : vector<8x128xf32>
    %35 = math.exp %34 : vector<8x128xf32>
    %cst_17 = arith.constant 1.000000e+00 : f32
    %36 = vector.broadcast %cst_17 : f32 to vector<8x128xf32>
    %37 = arith.addf %36, %35 : vector<8x128xf32>
    %38 = arith.divf %36, %37 : vector<8x128xf32>
    %39 = arith.mulf %33, %38 : vector<8x128xf32>
    %c3 = arith.constant 3 : index
    %c0_18 = arith.constant 0 : index
    %c0_19 = arith.constant 0 : index
    %40 = vector.load %arg3[%c3, %c0_18, %c0_19] : memref<4x128x128xf32, #tpu.memory_space<vmem>>, vector<1x128x128xf32>
    %41 = vector.shape_cast %40 : vector<1x128x128xf32> to vector<128x128xf32>
    %cst_20 = arith.constant dense<0.000000e+00> : vector<8x128xf32>
    %42 = tpu.matmul %39, %41, %cst_20 {dimension_numbers = #tpu.dot_dimension_numbers<[1], [0], [0], [1], [0, 0, 1, 1], [], []>} : vector<8x128xf32>, vector<128x128xf32>, vector<8x128xf32> -> vector<8x128xf32>
    %43 = vector.extract_strided_slice %0 {offsets = [3, 0], sizes = [1, 128], strides = [1, 1]} : vector<4x128xf32> to vector<1x128xf32>
    %44 = vector.broadcast %43 : vector<1x128xf32> to vector<8x128xf32>
    %45 = arith.addf %42, %44 : vector<8x128xf32>
    %c0_21 = arith.constant 0 : index
    %c0_22 = arith.constant 0 : index
    %46 = vector.load %arg5[%c0_21, %c0_22] : memref<8x128xf32, #tpu.memory_space<vmem>>, vector<8x128xf32>
    tpu.vector_store %arg5[%c0_21, %c0_22], %45 {strides = array<i32>} : memref<8x128xf32, #tpu.memory_space<vmem>>, vector<8x128xf32>,
    return
  }
  func.func @transform_0(%arg0: i32) -> (i32, i32) {
    %c0_i32 = arith.constant 0 : i32
    %c0_i32_0 = arith.constant 0 : i32
    %c0_i32_1 = arith.constant 0 : i32
    return %c0_i32, %c0_i32_0 : i32, i32
  }
  func.func @transform_1(%arg0: i32) -> (i32, i32) {
    %c0_i32 = arith.constant 0 : i32
    %c0_i32_0 = arith.constant 0 : i32
    return %arg0, %c0_i32 : i32, i32
  }
  func.func @transform_2(%arg0: i32) -> (i32, i32, i32) {
    %c0_i32 = arith.constant 0 : i32
    %c0_i32_0 = arith.constant 0 : i32
    %c0_i32_1 = arith.constant 0 : i32
    %c0_i32_2 = arith.constant 0 : i32
    return %c0_i32, %c0_i32_0, %c0_i32_1 : i32, i32, i32
  }
  func.func @transform_3(%arg0: i32) -> (i32, i32) {
    %c0_i32 = arith.constant 0 : i32
    %c0_i32_0 = arith.constant 0 : i32
    %c0_i32_1 = arith.constant 0 : i32
    return %c0_i32, %c0_i32_0 : i32, i32
  }
  func.func @transform_4(%arg0: i32) -> (i32, i32) {
    %c0_i32 = arith.constant 0 : i32
    %c0_i32_0 = arith.constant 0 : i32
    return %arg0, %c0_i32 : i32, i32
  }
}

</mosaic_0001>

<llo_original>
// kernel: deepsets_forward.1
$region0: #{deepsets_forward.1}
  #allocation0 [shape = 'u32[]', space=smem, size = 0x4, offset = 0x4, fixed_abs, tag = 'smem constant byte address 0x4 - core index']
  #allocation1 [shape = 'u32[144,128]{1,0:T(1,128)}', space=vmem, size = 0x12000, scoped, tag = 'internal scratch']
  %s0 = inlined_call_operand.vmem [shape: f32[8,64], index: 0, kind: input, shape index: {}]
  %s1 = inlined_call_operand.vmem [shape: f32[64,128], index: 1, kind: input, shape index: {}]
  %s2 = inlined_call_operand.hbm [shape: f32[4,128,128], index: 2, kind: input, shape index: {}]
  %s3 = inlined_call_operand.vmem [shape: f32[4,128], index: 3, kind: input, shape index: {}]
  %s4 = inlined_call_operand.vmem [shape: f32[8,128], index: 4, kind: output, shape index: {}]
  %s5 = sld [smem:[#allocation0]]
  $region30: #{deepsets_forward.1} parent=0
    _
  %s7 = ssub.s32 1, %s5
  %s8 = scalar_select 0, %s7, %s5
  $region1: #{deepsets_forward.1} parent=0
    #allocation2 [shape = 'u8[262144]{0}', space=vmem, size = 0x40000, scoped, tag = 'input window, operand 2, single buffered']
    #allocation3 [shape = 's32[1]{0}', space=sflag, size = 0x4, scoped, tag = 'scoped memory for deepsets_forward.1']
    %9 = vsyncpa [#allocation3], 0
    // Predicated region
    $region2: #{deepsets_forward.1} parent=1 // pred_check
      _
    $region3: #{deepsets_forward.1} parent=1 // pred_check_branch
      %11 = sbr.rel (0) target = $region5
    $region4: #{deepsets_forward.1} parent=1 // pred_region
      _
    $region5: #{deepsets_forward.1} parent=1 // pred_fallthru
      _
    // Predicated region
    $region6: #{deepsets_forward.1} parent=1 // pred_check
      _
    $region7: #{deepsets_forward.1} parent=1 // pred_check_branch
      %13 = sbr.rel (0) target = $region9
    $region8: #{deepsets_forward.1} parent=1 // pred_region
      _
    $region9: #{deepsets_forward.1} parent=1 // pred_fallthru
      _
    // Predicated region
    $region10: #{deepsets_forward.1} parent=1 // pred_check
      _
    $region11: #{deepsets_forward.1} parent=1 // pred_check_branch
      %15 = sbr.rel (0) target = $region13
    $region12: #{deepsets_forward.1} parent=1 // pred_region
      %s17 = ssub.s32 8192, 8192
      %18 = vsyncadd [#allocation3], %s17
      %s19 = sshll.u32 [#allocation2], 4
      %s20 = int_to_ptr.vmem [resolvable:$true] %s19
      %25 = dma.hbm_to_vmem [thread:$0]  %s2, 8192, %s20, [#allocation3], 128, 128, 8
    $region13: #{deepsets_forward.1} parent=1 // pred_fallthru
      _
    // Predicated region
    $region14: #{deepsets_forward.1} parent=1 // pred_check
      _
    $region15: #{deepsets_forward.1} parent=1 // pred_check_branch
      %27 = sbr.rel (0) target = $region17
    $region16: #{deepsets_forward.1} parent=1 // pred_region
      _
    $region17: #{deepsets_forward.1} parent=1 // pred_fallthru
      _
    // Predicated region
    $region18: #{deepsets_forward.1} parent=1 // pred_check
      _
    $region19: #{deepsets_forward.1} parent=1 // pred_check_branch
      %29 = sbr.rel (0) target = $region21
    $region20: #{deepsets_forward.1} parent=1 // pred_region
      %30 = dma.done [#allocation3], 8192
    $region21: #{deepsets_forward.1} parent=1 // pred_fallthru
      _
    %v31 = vld [vmem:[%s3] sm:$0xf]
    %v32 = vld [vmem:[%s1] sm:$0xff]
    %v33 = vld [vmem:[%s1 + $0x8] sm:$0xff]
    %v34 = vld [vmem:[%s1 + $0x10] sm:$0xff]
    %v35 = vld [vmem:[%s1 + $0x18] sm:$0xff]
    %v36 = vld [vmem:[%s1 + $0x20] sm:$0xff]
    %v37 = vld [vmem:[%s1 + $0x28] sm:$0xff]
    %v38 = vld [vmem:[%s1 + $0x30] sm:$0xff]
    %v39 = vld [vmem:[%s1 + $0x38] sm:$0xff]
    %v40 = vld [vmem:[#allocation2] sm:$0xff]
    %v41 = vld [vmem:[#allocation2 + $0x8] sm:$0xff]
    %v42 = vld [vmem:[#allocation2 + $0x10] sm:$0xff]
    %v43 = vld [vmem:[#allocation2 + $0x18] sm:$0xff]
    %v44 = vld [vmem:[#allocation2 + $0x20] sm:$0xff]
    %v45 = vld [vmem:[#allocation2 + $0x28] sm:$0xff]
    %v46 = vld [vmem:[#allocation2 + $0x30] sm:$0xff]
    %v47 = vld [vmem:[#allocation2 + $0x38] sm:$0xff]
    %v48 = vld [vmem:[#allocation2 + $0x40] sm:$0xff]
    %v49 = vld [vmem:[#allocation2 + $0x48] sm:$0xff]
    %v50 = vld [vmem:[#allocation2 + $0x50] sm:$0xff]
    %v51 = vld [vmem:[#allocation2 + $0x58] sm:$0xff]
    %v52 = vld [vmem:[#allocation2 + $0x60] sm:$0xff]
    %v53 = vld [vmem:[#allocation2 + $0x68] sm:$0xff]
    %v54 = vld [vmem:[#allocation2 + $0x70] sm:$0xff]
    %v55 = vld [vmem:[#allocation2 + $0x78] sm:$0xff]
    %v56 = vlaneseq
    %v57 = vshrl.u32 %v56, 7
    %v58 = vsub.s32 0, %v57
    %v59 = vrot.slane %v31, %v58
    %60 = vmatprep.subr.mxu0 0.0
    %61 = vmatpush1.msra.mxu0 %v40
    %62 = vmatprep.subr.mxu0 0.0
    %63 = vmatpush1.msra.mxu0 %v41
    %64 = vmatprep.subr.mxu0 0.0
    %65 = vmatpush1.msra.mxu0 %v42
    %66 = vmatprep.subr.mxu0 0.0
    %67 = vmatpush1.msra.mxu0 %v43
    %68 = vmatprep.subr.mxu0 0.0
    %69 = vmatpush1.msra.mxu0 %v44
    %70 = vmatprep.subr.mxu0 0.0
    %71 = vmatpush1.msra.mxu0 %v45
    %72 = vmatprep.subr.mxu0 0.0
    %73 = vmatpush1.msra.mxu0 %v46
    %74 = vmatprep.subr.mxu0 0.0
    %75 = vmatpush1.msra.mxu0 %v47
    %76 = vmatprep.subr.mxu0 0.0
    %77 = vmatpush1.msra.mxu0 %v48
    %78 = vmatprep.subr.mxu0 0.0
    %79 = vmatpush1.msra.mxu0 %v49
    %80 = vmatprep.subr.mxu0 0.0
    %81 = vmatpush1.msra.mxu0 %v50
    %82 = vmatprep.subr.mxu0 0.0
    %83 = vmatpush1.msra.mxu0 %v51
    %84 = vmatprep.subr.mxu0 0.0
    %85 = vmatpush1.msra.mxu0 %v52
    %86 = vmatprep.subr.mxu0 0.0
    %87 = vmatpush1.msra.mxu0 %v53
    %88 = vmatprep.subr.mxu0 0.0
    %89 = vmatpush1.msra.mxu0 %v54
    %90 = vmatprep.subr.mxu0 0.0
    %91 = vmatpush1.msra.mxu0 %v55
    %92 = vmatprep.subr.mxu0 0.0
    %93 = vmatpush1.msra.mxu0 0.0
    %94 = vmatprep.subr.mxu0 0.0
    %95 = vmatpush1.msra.mxu0 0.0
    %96 = vmatprep.subr.mxu0 0.0
    %97 = vmatpush1.msra.mxu0 0.0
    %98 = vmatprep.subr.mxu0 0.0
    %99 = vmatpush1.msra.mxu0 0.0
    %100 = vmatprep.subr.mxu0 0.0
    %101 = vmatpush1.msra.mxu0 0.0
    %102 = vmatprep.subr.mxu0 0.0
    %103 = vmatpush1.msra.mxu0 0.0
    %104 = vmatprep.subr.mxu0 0.0
    %105 = vmatpush1.msra.mxu0 0.0
    %106 = vmatprep.subr.mxu0 0.0
    %107 = vmatpush1.msra.mxu0 0.0
    %108 = vmatprep.subr.mxu0 0.0
    %109 = vmatpush1.msra.mxu0 0.0
    %110 = vmatprep.subr.mxu0 0.0
    %111 = vmatpush1.msra.mxu0 0.0
    %112 = vmatprep.subr.mxu0 0.0
    %113 = vmatpush1.msra.mxu0 0.0
    %114 = vmatprep.subr.mxu0 0.0
    %115 = vmatpush1.msra.mxu0 0.0
    %116 = vmatprep.subr.mxu0 0.0
    %117 = vmatpush1.msra.mxu0 0.0
    %118 = vmatprep.subr.mxu0 0.0
    %119 = vmatpush1.msra.mxu0 0.0
    %120 = vmatprep.subr.mxu0 0.0
    %121 = vmatpush1.msra.mxu0 0.0
    %122 = vmatprep.subr.mxu0 0.0
    %123 = vmatpush1.msra.mxu0 0.0
    %124 = vmatprep.mubr.f32.mxu0 0.0
    %125 = vmatmul.mubr.f32.gmra.mrb[0].mxu0 %v32
    %v126 = vpop.f32.mrb[0].mxu0
    %v127 = vadd.f32 %v59, %v126
    %v128 = vpop.f32.mrb[0].mxu0
    %129 = vmatprep.mubr.f32.mxu0 0.0
    %130 = vmatmul.mubr.f32.gmra.mrb[0].mxu0 %v33
    %v131 = vpop.f32.mrb[0].mxu0
    %v132 = vadd.f32 %v59, %v131
    %v133 = vpop.f32.mrb[0].mxu0
    %134 = vmatprep.mubr.f32.mxu0 0.0
    %135 = vmatmul.mubr.f32.gmra.mrb[0].mxu0 %v34
    %v136 = vpop.f32.mrb[0].mxu0
    %v137 = vadd.f32 %v59, %v136
    %v138 = vpop.f32.mrb[0].mxu0
    %139 = vmatprep.mubr.f32.mxu0 0.0
    %140 = vmatmul.mubr.f32.gmra.mrb[0].mxu0 %v35
    %v141 = vpop.f32.mrb[0].mxu0
    %v142 = vadd.f32 %v59, %v141
    %v143 = vpop.f32.mrb[0].mxu0
    %144 = vmatprep.mubr.f32.mxu0 0.0
    %145 = vmatmul.mubr.f32.gmra.mrb[0].mxu0 %v36
    %v146 = vpop.f32.mrb[0].mxu0
    %v147 = vadd.f32 %v59, %v146
    %v148 = vpop.f32.mrb[0].mxu0
    %149 = vmatprep.mubr.f32.mxu0 0.0
    %150 = vmatmul.mubr.f32.gmra.mrb[0].mxu0 %v37
    %v151 = vpop.f32.mrb[0].mxu0
    %v152 = vadd.f32 %v59, %v151
    %v153 = vpop.f32.mrb[0].mxu0
    %154 = vmatprep.mubr.f32.mxu0 0.0
    %155 = vmatmul.mubr.f32.gmra.mrb[0].mxu0 %v38
    %v156 = vpop.f32.mrb[0].mxu0
    %v157 = vadd.f32 %v59, %v156
    %v158 = vpop.f32.mrb[0].mxu0
    %159 = vmatprep.mubr.f32.mxu0 0.0
    %160 = vmatmul.mubr.f32.gmra.mrb[0].mxu0 %v39
    %v161 = vpop.f32.mrb[0].mxu0
    %v162 = vadd.f32 %v59, %v161
    %v163 = vpop.f32.mrb[0].mxu0
    %164 = vdwg.mxu0
    %v165 = vxor.u32 %v127, 2147483648
    %v166 = vxor.u32 %v132, 2147483648
    %v167 = vxor.u32 %v137, 2147483648
    %v168 = vxor.u32 %v142, 2147483648
    %v169 = vxor.u32 %v147, 2147483648
    %v170 = vxor.u32 %v152, 2147483648
    %v171 = vxor.u32 %v157, 2147483648
    %v172 = vxor.u32 %v162, 2147483648
    %v173 = vmul.f32 %v165, 1.442695
    %v174 = vpow.pop %v173
    %v175 = vmul.f32 %v166, 1.442695
    %v176 = vpow.pop %v175
    %v177 = vmul.f32 %v167, 1.442695
    %v178 = vpow.pop %v177
    %v179 = vmul.f32 %v168, 1.442695
    %v180 = vpow.pop %v179
    %v181 = vmul.f32 %v169, 1.442695
    %v182 = vpow.pop %v181
    %v183 = vmul.f32 %v170, 1.442695
    %v184 = vpow.pop %v183
    %v185 = vmul.f32 %v171, 1.442695
    %v186 = vpow.pop %v185
    %v187 = vmul.f32 %v172, 1.442695
    %v188 = vpow.pop %v187
    %v189 = vadd.f32 %v174, 1.0
    %v190 = vadd.f32 %v176, 1.0
    %v191 = vadd.f32 %v178, 1.0
    %v192 = vadd.f32 %v180, 1.0
    %v193 = vadd.f32 %v182, 1.0
    %v194 = vadd.f32 %v184, 1.0
    %v195 = vadd.f32 %v186, 1.0
    %v196 = vadd.f32 %v188, 1.0
    %v197 = vrcp.pop %v189
    %v198 = vmul.f32 1.0, %v197
    %v199 = vrcp.pop %v190
    %v200 = vmul.f32 1.0, %v199
    %v201 = vrcp.pop %v191
    %v202 = vmul.f32 1.0, %v201
    %v203 = vrcp.pop %v192
    %v204 = vmul.f32 1.0, %v203
    %v205 = vrcp.pop %v193
    %v206 = vmul.f32 1.0, %v205
    %v207 = vrcp.pop %v194
    %v208 = vmul.f32 1.0, %v207
    %v209 = vrcp.pop %v195
    %v210 = vmul.f32 1.0, %v209
    %v211 = vrcp.pop %v196
    %v212 = vmul.f32 1.0, %v211
    %v213 = vmul.f32 %v127, %v198
    %v214 = vmul.f32 %v132, %v200
    %v215 = vmul.f32 %v137, %v202
    %v216 = vmul.f32 %v142, %v204
    %v217 = vmul.f32 %v147, %v206
    %v218 = vmul.f32 %v152, %v208
    %v219 = vmul.f32 %v157, %v210
    %v220 = vmul.f32 %v162, %v212
    %s221 = scalar_lea.vmem [#allocation2], 128
    %v222 = vld [vmem:[%s221] sm:$0xff]
    %v223 = vld [vmem:[%s221 + $0x8] sm:$0xff]
    %v224 = vld [vmem:[%s221 + $0x10] sm:$0xff]
    %v225 = vld [vmem:[%s221 + $0x18] sm:$0xff]
    %v226 = vld [vmem:[%s221 + $0x20] sm:$0xff]
    %v227 = vld [vmem:[%s221 + $0x28] sm:$0xff]
    %v228 = vld [vmem:[%s221 + $0x30] sm:$0xff]
    %v229 = vld [vmem:[%s221 + $0x38] sm:$0xff]
    %v230 = vld [vmem:[%s221 + $0x40] sm:$0xff]
    %v231 = vld [vmem:[%s221 + $0x48] sm:$0xff]
    %v232 = vld [vmem:[%s221 + $0x50] sm:$0xff]
    %v233 = vld [vmem:[%s221 + $0x58] sm:$0xff]
    %v234 = vld [vmem:[%s221 + $0x60] sm:$0xff]
    %v235 = vld [vmem:[%s221 + $0x68] sm:$0xff]
    %v236 = vld [vmem:[%s221 + $0x70] sm:$0xff]
    %v237 = vld [vmem:[%s221 + $0x78] sm:$0xff]
    %v238 = vlaneseq
    %v239 = vshrl.u32 %v238, 7
    %v240 = vsub.s32 1, %v239
    %v241 = vrot.slane %v31, %v240
    %242 = vmatprep.subr.mxu0 0.0
    %243 = vmatpush1.msra.mxu0 %v222
    %244 = vmatprep.subr.mxu0 0.0
    %245 = vmatpush1.msra.mxu0 %v223
    %246 = vmatprep.subr.mxu0 0.0
    %247 = vmatpush1.msra.mxu0 %v224
    %248 = vmatprep.subr.mxu0 0.0
    %249 = vmatpush1.msra.mxu0 %v225
    %250 = vmatprep.subr.mxu0 0.0
    %251 = vmatpush1.msra.mxu0 %v226
    %252 = vmatprep.subr.mxu0 0.0
    %253 = vmatpush1.msra.mxu0 %v227
    %254 = vmatprep.subr.mxu0 0.0
    %255 = vmatpush1.msra.mxu0 %v228
    %256 = vmatprep.subr.mxu0 0.0
    %257 = vmatpush1.msra.mxu0 %v229
    %258 = vmatprep.subr.mxu0 0.0
    %259 = vmatpush1.msra.mxu0 %v230
    %260 = vmatprep.subr.mxu0 0.0
    %261 = vmatpush1.msra.mxu0 %v231
    %262 = vmatprep.subr.mxu0 0.0
    %263 = vmatpush1.msra.mxu0 %v232
    %264 = vmatprep.subr.mxu0 0.0
    %265 = vmatpush1.msra.mxu0 %v233
    %266 = vmatprep.subr.mxu0 0.0
    %267 = vmatpush1.msra.mxu0 %v234
    %268 = vmatprep.subr.mxu0 0.0
    %269 = vmatpush1.msra.mxu0 %v235
    %270 = vmatprep.subr.mxu0 0.0
    %271 = vmatpush1.msra.mxu0 %v236
    %272 = vmatprep.subr.mxu0 0.0
    %273 = vmatpush1.msra.mxu0 %v237
    %274 = vmatprep.subr.mxu0 0.0
    %275 = vmatpush1.msra.mxu0 0.0
    %276 = vmatprep.subr.mxu0 0.0
    %277 = vmatpush1.msra.mxu0 0.0
    %278 = vmatprep.subr.mxu0 0.0
    %279 = vmatpush1.msra.mxu0 0.0
    %280 = vmatprep.subr.mxu0 0.0
    %281 = vmatpush1.msra.mxu0 0.0
    %282 = vmatprep.subr.mxu0 0.0
    %283 = vmatpush1.msra.mxu0 0.0
    %284 = vmatprep.subr.mxu0 0.0
    %285 = vmatpush1.msra.mxu0 0.0
    %286 = vmatprep.subr.mxu0 0.0
    %287 = vmatpush1.msra.mxu0 0.0
    %288 = vmatprep.subr.mxu0 0.0
    %289 = vmatpush1.msra.mxu0 0.0
    %290 = vmatprep.subr.mxu0 0.0
    %291 = vmatpush1.msra.mxu0 0.0
    %292 = vmatprep.subr.mxu0 0.0
    %293 = vmatpush1.msra.mxu0 0.0
    %294 = vmatprep.subr.mxu0 0.0
    %295 = vmatpush1.msra.mxu0 0.0
    %296 = vmatprep.subr.mxu0 0.0
    %297 = vmatpush1.msra.mxu0 0.0
    %298 = vmatprep.subr.mxu0 0.0
    %299 = vmatpush1.msra.mxu0 0.0
    %300 = vmatprep.subr.mxu0 0.0
    %301 = vmatpush1.msra.mxu0 0.0
    %302 = vmatprep.subr.mxu0 0.0
    %303 = vmatpush1.msra.mxu0 0.0
    %304 = vmatprep.subr.mxu0 0.0
    %305 = vmatpush1.msra.mxu0 0.0
    %306 = vmatprep.mubr.f32.mxu0 0.0
    %307 = vmatmul.mubr.f32.gmra.mrb[0].mxu0 %v213
    %v308 = vpop.f32.mrb[0].mxu0
    %v309 = vadd.f32 %v241, %v308
    %v310 = vpop.f32.mrb[0].mxu0
    %311 = vmatprep.mubr.f32.mxu0 0.0
    %312 = vmatmul.mubr.f32.gmra.mrb[0].mxu0 %v214
    %v313 = vpop.f32.mrb[0].mxu0
    %v314 = vadd.f32 %v241, %v313
    %v315 = vpop.f32.mrb[0].mxu0
    %316 = vmatprep.mubr.f32.mxu0 0.0
    %317 = vmatmul.mubr.f32.gmra.mrb[0].mxu0 %v215
    %v318 = vpop.f32.mrb[0].mxu0
    %v319 = vadd.f32 %v241, %v318
    %v320 = vpop.f32.mrb[0].mxu0
    %321 = vmatprep.mubr.f32.mxu0 0.0
    %322 = vmatmul.mubr.f32.gmra.mrb[0].mxu0 %v216
    %v323 = vpop.f32.mrb[0].mxu0
    %v324 = vadd.f32 %v241, %v323
    %v325 = vpop.f32.mrb[0].mxu0
    %326 = vmatprep.mubr.f32.mxu0 0.0
    %327 = vmatmul.mubr.f32.gmra.mrb[0].mxu0 %v217
    %v328 = vpop.f32.mrb[0].mxu0
    %v329 = vadd.f32 %v241, %v328
    %v330 = vpop.f32.mrb[0].mxu0
    %331 = vmatprep.mubr.f32.mxu0 0.0
    %332 = vmatmul.mubr.f32.gmra.mrb[0].mxu0 %v218
    %v333 = vpop.f32.mrb[0].mxu0
    %v334 = vadd.f32 %v241, %v333
    %v335 = vpop.f32.mrb[0].mxu0
    %336 = vmatprep.mubr.f32.mxu0 0.0
    %337 = vmatmul.mubr.f32.gmra.mrb[0].mxu0 %v219
    %v338 = vpop.f32.mrb[0].mxu0
    %v339 = vadd.f32 %v241, %v338
    %v340 = vpop.f32.mrb[0].mxu0
    %341 = vmatprep.mubr.f32.mxu0 0.0
    %342 = vmatmul.mubr.f32.gmra.mrb[0].mxu0 %v220
    %v343 = vpop.f32.mrb[0].mxu0
    %v344 = vadd.f32 %v241, %v343
    %v345 = vpop.f32.mrb[0].mxu0
    %346 = vdwg.mxu0
    %v347 = vxor.u32 %v309, 2147483648
    %v348 = vxor.u32 %v314, 2147483648
    %v349 = vxor.u32 %v319, 2147483648
    %v350 = vxor.u32 %v324, 2147483648
    %v351 = vxor.u32 %v329, 2147483648
    %v352 = vxor.u32 %v334, 2147483648
    %v353 = vxor.u32 %v339, 2147483648
    %v354 = vxor.u32 %v344, 2147483648
    %v355 = vmul.f32 %v347, 1.442695
    %v356 = vpow.pop %v355
    %v357 = vmul.f32 %v348, 1.442695
    %v358 = vpow.pop %v357
    %v359 = vmul.f32 %v349, 1.442695
    %v360 = vpow.pop %v359
    %v361 = vmul.f32 %v350, 1.442695
    %v362 = vpow.pop %v361
    %v363 = vmul.f32 %v351, 1.442695
    %v364 = vpow.pop %v363
    %v365 = vmul.f32 %v352, 1.442695
    %v366 = vpow.pop %v365
    %v367 = vmul.f32 %v353, 1.442695
    %v368 = vpow.pop %v367
    %v369 = vmul.f32 %v354, 1.442695
    %v370 = vpow.pop %v369
    %v371 = vadd.f32 %v356, 1.0
    %v372 = vadd.f32 %v358, 1.0
    %v373 = vadd.f32 %v360, 1.0
    %v374 = vadd.f32 %v362, 1.0
    %v375 = vadd.f32 %v364, 1.0
    %v376 = vadd.f32 %v366, 1.0
    %v377 = vadd.f32 %v368, 1.0
    %v378 = vadd.f32 %v370, 1.0
    %v379 = vrcp.pop %v371
    %v380 = vmul.f32 1.0, %v379
    %v381 = vrcp.pop %v372
    %v382 = vmul.f32 1.0, %v381
    %v383 = vrcp.pop %v373
    %v384 = vmul.f32 1.0, %v383
    %v385 = vrcp.pop %v374
    %v386 = vmul.f32 1.0, %v385
    %v387 = vrcp.pop %v375
    %v388 = vmul.f32 1.0, %v387
    %v389 = vrcp.pop %v376
    %v390 = vmul.f32 1.0, %v389
    %v391 = vrcp.pop %v377
    %v392 = vmul.f32 1.0, %v391
    %v393 = vrcp.pop %v378
    %v394 = vmul.f32 1.0, %v393
    %v395 = vmul.f32 %v309, %v380
    %v396 = vmul.f32 %v314, %v382
    %v397 = vmul.f32 %v319, %v384
    %v398 = vmul.f32 %v324, %v386
    %v399 = vmul.f32 %v329, %v388
    %v400 = vmul.f32 %v334, %v390
    %v401 = vmul.f32 %v339, %v392
    %v402 = vmul.f32 %v344, %v394
    %v403 = vld [vmem:[%s0] sm:$0xff]
    %vm404 = vcmask 523264
    %v406 = vsel %vm404, %v403, 0
    %408 = vmatprep.subr.mxu0 0.0
    %409 = vmatpush1.msra.mxu0 %v395
    %410 = vmatprep.subr.mxu0 0.0
    %411 = vmatpush1.msra.mxu0 %v396
    %412 = vmatprep.subr.mxu0 0.0
    %413 = vmatpush1.msra.mxu0 %v397
    %414 = vmatprep.subr.mxu0 0.0
    %415 = vmatpush1.msra.mxu0 %v398
    %416 = vmatprep.subr.mxu0 0.0
    %417 = vmatpush1.msra.mxu0 %v399
    %418 = vmatprep.subr.mxu0 0.0
    %419 = vmatpush1.msra.mxu0 %v400
    %420 = vmatprep.subr.mxu0 0.0
    %421 = vmatpush1.msra.mxu0 %v401
    %422 = vmatprep.subr.mxu0 0.0
    %423 = vmatpush1.msra.mxu0 %v402
    %424 = vmatprep.subr.mxu0 0.0
    %425 = vmatpush1.msra.mxu0 0.0
    %426 = vmatprep.subr.mxu0 0.0
    %427 = vmatpush1.msra.mxu0 0.0
    %428 = vmatprep.subr.mxu0 0.0
    %429 = vmatpush1.msra.mxu0 0.0
    %430 = vmatprep.subr.mxu0 0.0
    %431 = vmatpush1.msra.mxu0 0.0
    %432 = vmatprep.subr.mxu0 0.0
    %433 = vmatpush1.msra.mxu0 0.0
    %434 = vmatprep.subr.mxu0 0.0
    %435 = vmatpush1.msra.mxu0 0.0
    %436 = vmatprep.subr.mxu0 0.0
    %437 = vmatpush1.msra.mxu0 0.0
    %438 = vmatprep.subr.mxu0 0.0
    %439 = vmatpush1.msra.mxu0 0.0
    %440 = vmatprep.subr.mxu0 0.0
    %441 = vmatpush1.msra.mxu0 0.0
    %442 = vmatprep.subr.mxu0 0.0
    %443 = vmatpush1.msra.mxu0 0.0
    %444 = vmatprep.subr.mxu0 0.0
    %445 = vmatpush1.msra.mxu0 0.0
    %446 = vmatprep.subr.mxu0 0.0
    %447 = vmatpush1.msra.mxu0 0.0
    %448 = vmatprep.subr.mxu0 0.0
    %449 = vmatpush1.msra.mxu0 0.0
    %450 = vmatprep.subr.mxu0 0.0
    %451 = vmatpush1.msra.mxu0 0.0
    %452 = vmatprep.subr.mxu0 0.0
    %453 = vmatpush1.msra.mxu0 0.0
    %454 = vmatprep.subr.mxu0 0.0
    %455 = vmatpush1.msra.mxu0 0.0
    %456 = vmatprep.subr.mxu0 0.0
    %457 = vmatpush1.msra.mxu0 0.0
    %458 = vmatprep.subr.mxu0 0.0
    %459 = vmatpush1.msra.mxu0 0.0
    %460 = vmatprep.subr.mxu0 0.0
    %461 = vmatpush1.msra.mxu0 0.0
    %462 = vmatprep.subr.mxu0 0.0
    %463 = vmatpush1.msra.mxu0 0.0
    %464 = vmatprep.subr.mxu0 0.0
    %465 = vmatpush1.msra.mxu0 0.0
    %466 = vmatprep.subr.mxu0 0.0
    %467 = vmatpush1.msra.mxu0 0.0
    %468 = vmatprep.subr.mxu0 0.0
    %469 = vmatpush1.msra.mxu0 0.0
    %470 = vmatprep.subr.mxu0 0.0
    %471 = vmatpush1.msra.mxu0 0.0
    %472 = vmatprep.mubr.f32.mxu0 0.0
    %473 = vmatmul.mubr.f32.gmra.mrb[0].mxu0 %v406
    %v474 = vpop.f32.mrb[0].mxu0
    %v475 = vadd.f32 0.0, %v474
    %v476 = vpop.f32.mrb[0].mxu0
    %477 = vdwg.mxu0
    %s478 = scalar_lea.vmem [#allocation2], 256
    %v479 = vld [vmem:[%s478] sm:$0xff]
    %v480 = vld [vmem:[%s478 + $0x8] sm:$0xff]
    %v481 = vld [vmem:[%s478 + $0x10] sm:$0xff]
    %v482 = vld [vmem:[%s478 + $0x18] sm:$0xff]
    %v483 = vld [vmem:[%s478 + $0x20] sm:$0xff]
    %v484 = vld [vmem:[%s478 + $0x28] sm:$0xff]
    %v485 = vld [vmem:[%s478 + $0x30] sm:$0xff]
    %v486 = vld [vmem:[%s478 + $0x38] sm:$0xff]
    %v487 = vld [vmem:[%s478 + $0x40] sm:$0xff]
    %v488 = vld [vmem:[%s478 + $0x48] sm:$0xff]
    %v489 = vld [vmem:[%s478 + $0x50] sm:$0xff]
    %v490 = vld [vmem:[%s478 + $0x58] sm:$0xff]
    %v491 = vld [vmem:[%s478 + $0x60] sm:$0xff]
    %v492 = vld [vmem:[%s478 + $0x68] sm:$0xff]
    %v493 = vld [vmem:[%s478 + $0x70] sm:$0xff]
    %v494 = vld [vmem:[%s478 + $0x78] sm:$0xff]
    %v495 = vlaneseq
    %v496 = vshrl.u32 %v495, 7
    %v497 = vsub.s32 2, %v496
    %v498 = vrot.slane %v31, %v497
    %499 = vmatprep.subr.mxu0 0.0
    %500 = vmatpush1.msra.mxu0 %v479
    %501 = vmatprep.subr.mxu0 0.0
    %502 = vmatpush1.msra.mxu0 %v480
    %503 = vmatprep.subr.mxu0 0.0
    %504 = vmatpush1.msra.mxu0 %v481
    %505 = vmatprep.subr.mxu0 0.0
    %506 = vmatpush1.msra.mxu0 %v482
    %507 = vmatprep.subr.mxu0 0.0
    %508 = vmatpush1.msra.mxu0 %v483
    %509 = vmatprep.subr.mxu0 0.0
    %510 = vmatpush1.msra.mxu0 %v484
    %511 = vmatprep.subr.mxu0 0.0
    %512 = vmatpush1.msra.mxu0 %v485
    %513 = vmatprep.subr.mxu0 0.0
    %514 = vmatpush1.msra.mxu0 %v486
    %515 = vmatprep.subr.mxu0 0.0
    %516 = vmatpush1.msra.mxu0 %v487
    %517 = vmatprep.subr.mxu0 0.0
    %518 = vmatpush1.msra.mxu0 %v488
    %519 = vmatprep.subr.mxu0 0.0
    %520 = vmatpush1.msra.mxu0 %v489
    %521 = vmatprep.subr.mxu0 0.0
    %522 = vmatpush1.msra.mxu0 %v490
    %523 = vmatprep.subr.mxu0 0.0
    %524 = vmatpush1.msra.mxu0 %v491
    %525 = vmatprep.subr.mxu0 0.0
    %526 = vmatpush1.msra.mxu0 %v492
    %527 = vmatprep.subr.mxu0 0.0
    %528 = vmatpush1.msra.mxu0 %v493
    %529 = vmatprep.subr.mxu0 0.0
    %530 = vmatpush1.msra.mxu0 %v494
    %531 = vmatprep.subr.mxu0 0.0
    %532 = vmatpush1.msra.mxu0 0.0
    %533 = vmatprep.subr.mxu0 0.0
    %534 = vmatpush1.msra.mxu0 0.0
    %535 = vmatprep.subr.mxu0 0.0
    %536 = vmatpush1.msra.mxu0 0.0
    %537 = vmatprep.subr.mxu0 0.0
    %538 = vmatpush1.msra.mxu0 0.0
    %539 = vmatprep.subr.mxu0 0.0
    %540 = vmatpush1.msra.mxu0 0.0
    %541 = vmatprep.subr.mxu0 0.0
    %542 = vmatpush1.msra.mxu0 0.0
    %543 = vmatprep.subr.mxu0 0.0
    %544 = vmatpush1.msra.mxu0 0.0
    %545 = vmatprep.subr.mxu0 0.0
    %546 = vmatpush1.msra.mxu0 0.0
    %547 = vmatprep.subr.mxu0 0.0
    %548 = vmatpush1.msra.mxu0 0.0
    %549 = vmatprep.subr.mxu0 0.0
    %550 = vmatpush1.msra.mxu0 0.0
    %551 = vmatprep.subr.mxu0 0.0
    %552 = vmatpush1.msra.mxu0 0.0
    %553 = vmatprep.subr.mxu0 0.0
    %554 = vmatpush1.msra.mxu0 0.0
    %555 = vmatprep.subr.mxu0 0.0
    %556 = vmatpush1.msra.mxu0 0.0
    %557 = vmatprep.subr.mxu0 0.0
    %558 = vmatpush1.msra.mxu0 0.0
    %559 = vmatprep.subr.mxu0 0.0
    %560 = vmatpush1.msra.mxu0 0.0
    %561 = vmatprep.subr.mxu0 0.0
    %562 = vmatpush1.msra.mxu0 0.0
    %563 = vmatprep.mubr.f32.mxu0 0.0
    %564 = vmatmul.mubr.f32.gmra.mrb[0].mxu0 %v475
    %v565 = vpop.f32.mrb[0].mxu0
    %v566 = vadd.f32 %v498, %v565
    %v567 = vpop.f32.mrb[0].mxu0
    %568 = vdwg.mxu0
    %v569 = vxor.u32 %v566, 2147483648
    %v570 = vmul.f32 %v569, 1.442695
    %v571 = vpow.pop %v570
    %v572 = vadd.f32 %v571, 1.0
    %v573 = vrcp.pop %v572
    %v574 = vmul.f32 1.0, %v573
    %v575 = vmul.f32 %v566, %v574
    %s576 = scalar_lea.vmem [#allocation2], 384
    %v577 = vld [vmem:[%s576] sm:$0xff]
    %v578 = vld [vmem:[%s576 + $0x8] sm:$0xff]
    %v579 = vld [vmem:[%s576 + $0x10] sm:$0xff]
    %v580 = vld [vmem:[%s576 + $0x18] sm:$0xff]
    %v581 = vld [vmem:[%s576 + $0x20] sm:$0xff]
    %v582 = vld [vmem:[%s576 + $0x28] sm:$0xff]
    %v583 = vld [vmem:[%s576 + $0x30] sm:$0xff]
    %v584 = vld [vmem:[%s576 + $0x38] sm:$0xff]
    %v585 = vld [vmem:[%s576 + $0x40] sm:$0xff]
    %v586 = vld [vmem:[%s576 + $0x48] sm:$0xff]
    %v587 = vld [vmem:[%s576 + $0x50] sm:$0xff]
    %v588 = vld [vmem:[%s576 + $0x58] sm:$0xff]
    %v589 = vld [vmem:[%s576 + $0x60] sm:$0xff]
    %v590 = vld [vmem:[%s576 + $0x68] sm:$0xff]
    %v591 = vld [vmem:[%s576 + $0x70] sm:$0xff]
    %v592 = vld [vmem:[%s576 + $0x78] sm:$0xff]
    %v593 = vlaneseq
    %v594 = vshrl.u32 %v593, 7
    %v595 = vsub.s32 3, %v594
    %v596 = vrot.slane %v31, %v595
    %597 = vmatprep.subr.mxu0 0.0
    %598 = vmatpush1.msra.mxu0 %v577
    %599 = vmatprep.subr.mxu0 0.0
    %600 = vmatpush1.msra.mxu0 %v578
    %601 = vmatprep.subr.mxu0 0.0
    %602 = vmatpush1.msra.mxu0 %v579
    %603 = vmatprep.subr.mxu0 0.0
    %604 = vmatpush1.msra.mxu0 %v580
    %605 = vmatprep.subr.mxu0 0.0
    %606 = vmatpush1.msra.mxu0 %v581
    %607 = vmatprep.subr.mxu0 0.0
    %608 = vmatpush1.msra.mxu0 %v582
    %609 = vmatprep.subr.mxu0 0.0
    %610 = vmatpush1.msra.mxu0 %v583
    %611 = vmatprep.subr.mxu0 0.0
    %612 = vmatpush1.msra.mxu0 %v584
    %613 = vmatprep.subr.mxu0 0.0
    %614 = vmatpush1.msra.mxu0 %v585
    %615 = vmatprep.subr.mxu0 0.0
    %616 = vmatpush1.msra.mxu0 %v586
    %617 = vmatprep.subr.mxu0 0.0
    %618 = vmatpush1.msra.mxu0 %v587
    %619 = vmatprep.subr.mxu0 0.0
    %620 = vmatpush1.msra.mxu0 %v588
    %621 = vmatprep.subr.mxu0 0.0
    %622 = vmatpush1.msra.mxu0 %v589
    %623 = vmatprep.subr.mxu0 0.0
    %624 = vmatpush1.msra.mxu0 %v590
    %625 = vmatprep.subr.mxu0 0.0
    %626 = vmatpush1.msra.mxu0 %v591
    %627 = vmatprep.subr.mxu0 0.0
    %628 = vmatpush1.msra.mxu0 %v592
    %629 = vmatprep.subr.mxu0 0.0
    %630 = vmatpush1.msra.mxu0 0.0
    %631 = vmatprep.subr.mxu0 0.0
    %632 = vmatpush1.msra.mxu0 0.0
    %633 = vmatprep.subr.mxu0 0.0
    %634 = vmatpush1.msra.mxu0 0.0
    %635 = vmatprep.subr.mxu0 0.0
    %636 = vmatpush1.msra.mxu0 0.0
    %637 = vmatprep.subr.mxu0 0.0
    %638 = vmatpush1.msra.mxu0 0.0
    %639 = vmatprep.subr.mxu0 0.0
    %640 = vmatpush1.msra.mxu0 0.0
    %641 = vmatprep.subr.mxu0 0.0
    %642 = vmatpush1.msra.mxu0 0.0
    %643 = vmatprep.subr.mxu0 0.0
    %644 = vmatpush1.msra.mxu0 0.0
    %645 = vmatprep.subr.mxu0 0.0
    %646 = vmatpush1.msra.mxu0 0.0
    %647 = vmatprep.subr.mxu0 0.0
    %648 = vmatpush1.msra.mxu0 0.0
    %649 = vmatprep.subr.mxu0 0.0
    %650 = vmatpush1.msra.mxu0 0.0
    %651 = vmatprep.subr.mxu0 0.0
    %652 = vmatpush1.msra.mxu0 0.0
    %653 = vmatprep.subr.mxu0 0.0
    %654 = vmatpush1.msra.mxu0 0.0
    %655 = vmatprep.subr.mxu0 0.0
    %656 = vmatpush1.msra.mxu0 0.0
    %657 = vmatprep.subr.mxu0 0.0
    %658 = vmatpush1.msra.mxu0 0.0
    %659 = vmatprep.subr.mxu0 0.0
    %660 = vmatpush1.msra.mxu0 0.0
    %661 = vmatprep.mubr.f32.mxu0 0.0
    %662 = vmatmul.mubr.f32.gmra.mrb[0].mxu0 %v575
    %v663 = vpop.f32.mrb[0].mxu0
    %v664 = vadd.f32 %v596, %v663
    %v665 = vpop.f32.mrb[0].mxu0
    %666 = vdwg.mxu0
    %667 = vst [vmem:[%s4] sm:$0xff] %v664
    // Predicated region
    $region22: #{deepsets_forward.1} parent=1 // pred_check
      _
    $region23: #{deepsets_forward.1} parent=1 // pred_check_branch
      %669 = sbr.rel (0) target = $region25
    $region24: #{deepsets_forward.1} parent=1 // pred_region
      _
    $region25: #{deepsets_forward.1} parent=1 // pred_fallthru
      _
    // Predicated region
    $region26: #{deepsets_forward.1} parent=1 // pred_check
      _
    $region27: #{deepsets_forward.1} parent=1 // pred_check_branch
      %671 = sbr.rel (0) target = $region29
    $region28: #{deepsets_forward.1} parent=1 // pred_region
      _
    $region29: #{deepsets_forward.1} parent=1 // pred_fallthru
      _
    %672 = vsyncpa [#allocation3], 1

</llo_original>
